<compile_context>
chip_gen: v6e
topology: v6e:2x2x1
jax: 0.10.0
libtpu: 0.0.40
codegen_flags: <defaults>
</compile_context>

<pallas_src>
import math

import jax
import jax.numpy as jnp
from jax.experimental import pallas as pl
from jax.experimental.pallas import tpu as pltpu

_LANE = 128                      # vreg lane width / required lane alignment
_MAX_LANES = 4096                # cap on the lane (last) dim of the HBM slab
_MAX_DMAS = 8                    # max outstanding HBM->HBM copies
_MIN_DMA_BYTES = 64 * 1024       # don't split below ~64 KiB per DMA
_MIN_KERNEL_BYTES = 1 << 20      # below ~1 MiB the launch cost dominates


def _resolve_shape(shape, n_elem):
    """torch.view-style shape resolution (supports a single -1 entry)."""
    shape = [int(d) for d in shape]
    if shape.count(-1) > 1:
        raise ValueError("only one -1 dimension is allowed")
    if -1 in shape:
        known = int(math.prod(d for d in shape if d != -1))
        if known <= 0 or n_elem % known != 0:
            raise ValueError(f"cannot infer -1 for {shape} from {n_elem} elements")
        shape[shape.index(-1)] = n_elem // known
    if int(math.prod(shape)) != n_elem:
        raise ValueError(f"cannot reshape {n_elem} elements into {shape}")
    return tuple(shape)


def _lane_dim(total):
    """Largest multiple-of-128 divisor of `total`, capped at _MAX_LANES."""
    hi = min(_MAX_LANES, (total // _LANE) * _LANE)
    for c in range(hi, _LANE - 1, -_LANE):
        if total % c == 0:
            return c
    return _LANE  # unreachable when total % 128 == 0


def _chunk_rows(R, n_chunks):
    """Split R rows into <= n_chunks contiguous chunks (static, sublane-friendly)."""
    base = -(-R // n_chunks)                      # ceil div
    if base % 8 and R > 8:                        # prefer 8-row aligned chunks
        base = min(R, ((base + 7) // 8) * 8)
    chunks, start = [], 0
    while start < R:
        rows = min(base, R - start)
        chunks.append((start, rows))
        start += rows
    return chunks


def _hbm_identity_copy(flat, total, itemsize):
    """Direct HBM->HBM DMA copy of a flat, 128-aligned buffer (no VMEM staging)."""
    C = _lane_dim(total)                          # multiple of 128
    R = total // C
    total_bytes = total * itemsize
    n_chunks = max(1, min(_MAX_DMAS, total_bytes // _MIN_DMA_BYTES))
    n_chunks = min(n_chunks, R)
    chunks = _chunk_rows(R, n_chunks)             # static (start, rows) pairs
    n_sem = len(chunks)

    def kernel(x_hbm, o_hbm, sem):
        # Issue all chunk copies (multiple outstanding DMAs), then wait.
        copies = []
        for i, (s, r) in enumerate(chunks):
            cp = pltpu.make_async_copy(
                x_hbm.at[pl.ds(s, r), :],
                o_hbm.at[pl.ds(s, r), :],
                sem.at[i],
            )
            cp.start()
            copies.append(cp)
        for cp in copies:
            cp.wait()

    out = pl.pallas_call(
        kernel,
        out_shape=jax.ShapeDtypeStruct((R, C), flat.dtype),
        in_specs=[pl.BlockSpec(memory_space=pl.ANY)],
        out_specs=pl.BlockSpec(memory_space=pl.ANY),
        scratch_shapes=[pltpu.SemaphoreType.DMA((n_sem,))],
        cost_estimate=pl.CostEstimate(
            flops=0, transcendentals=0, bytes_accessed=2 * total_bytes),
    )(flat.reshape(R, C))
    return out.reshape(total)


def pallas_reshape(x, shape, *, force_kernel=False):
    """Equivalent of torch Reshape(shape): x.view(x.shape[0], *shape)."""
    B = x.shape[0]
    N = int(math.prod(x.shape[1:]))
    shape = _resolve_shape(shape, N)
    out_shape = (B, *shape)

    T = B * N
    itemsize = jnp.dtype(x.dtype).itemsize

    # Reshape is metadata-only: short-circuit small / empty / unaligned /
    # exotic-dtype cases (no copy, zero HBM traffic) -- strictly faster than
    # any kernel.  The DMA kernel is used for large aligned buffers or when
    # explicitly forced (e.g. for testing).
    # TODO(synk): non-multiple-of-128 element counts take the metadata path
    # rather than a ragged-tail DMA (the old jnp.pad path cost 2-3x traffic).
    use_kernel = (force_kernel or T * itemsize >= _MIN_KERNEL_BYTES)
    if (not use_kernel) or T == 0 or T % _LANE != 0 or itemsize not in (1, 2, 4):
        return jnp.reshape(x, out_shape)

    out_flat = _hbm_identity_copy(x.reshape(T), T, itemsize)
    return out_flat.reshape(out_shape)


if __name__ == "__main__":
    key = jax.random.PRNGKey(0)
    # Small NCHW-style input: batch=2, channels=4, spatial=16x16.
    x = jax.random.normal(key, (2, 4, 16, 16), dtype=jnp.float32)

    # Kernel path (forced; default path short-circuits small tensors).
    y = jax.block_until_ready(pallas_reshape(x, [16, 64], force_kernel=True))
    ref = jnp.reshape(x, (x.shape[0], 16, 64))
    assert y.shape == (2, 16, 64), y.shape
    assert y.dtype == x.dtype
    assert bool(jnp.array_equal(y, ref))

    # torch-style -1 inference through the kernel path: (2,4,16,16) -> (2,1024)
    y2 = jax.block_until_ready(pallas_reshape(x, [-1], force_kernel=True))
    assert y2.shape == (2, 1024), y2.shape
    assert bool(jnp.array_equal(y2, jnp.reshape(x, (2, 1024))))

    # Slightly larger (still small) input exercising the multi-chunk DMA path.
    x3 = jax.random.normal(key, (2, 4, 64, 64), dtype=jnp.float32)
    y3 = jax.block_until_ready(pallas_reshape(x3, [4, -1], force_kernel=True))
    assert y3.shape == (2, 4, 4096), y3.shape
    assert bool(jnp.array_equal(y3, jnp.reshape(x3, (2, 4, 4096))))

    # Default path: metadata-only short-circuit for small tensors.
    y4 = jax.block_until_ready(pallas_reshape(x, [16, 64]))
    assert bool(jnp.array_equal(y4, ref))

    print("KERNEL_OK")
</pallas_src>

<mosaic_0001>
module attributes {stable_mosaic.version = 11 : i64} {
  func.func @kernel(%arg0: memref<1x2048xf32, #tpu.memory_space<any>>, %arg1: memref<1x2048xf32, #tpu.memory_space<any>>, %arg2: memref<1x!tpu.dma_semaphore, #tpu.memory_space<semaphore_mem>>) attributes {dimension_semantics = [], scalar_prefetch = 0 : i64, scratch_operands = 1 : i64, tpu.core_type = #tpu.core_type<tc>} {
    %c0_i32 = arith.constant 0 : i32
    %c0_i32_0 = arith.constant 0 : i32
    %c0_i32_1 = arith.constant 0 : i32
    %0 = tpu.memref_slice %arg0[%c0_i32_0, %c0_i32_1] : memref<1x2048xf32, #tpu.memory_space<any>> -> memref<1x2048xf32, #tpu.memory_space<any>>
    %c0_i32_2 = arith.constant 0 : i32
    %c0_i32_3 = arith.constant 0 : i32
    %1 = tpu.memref_slice %arg1[%c0_i32_2, %c0_i32_3] : memref<1x2048xf32, #tpu.memory_space<any>> -> memref<1x2048xf32, #tpu.memory_space<any>>
    %2 = tpu.memref_slice %arg2[%c0_i32] : memref<1x!tpu.dma_semaphore, #tpu.memory_space<semaphore_mem>> -> memref<1x!tpu.dma_semaphore, #tpu.memory_space<semaphore_mem>>
    %3 = tpu.memref_squeeze %2 : memref<1x!tpu.dma_semaphore, #tpu.memory_space<semaphore_mem>> -> memref<!tpu.dma_semaphore, #tpu.memory_space<semaphore_mem>>
    tpu.enqueue_dma source(%0 : memref<1x2048xf32, #tpu.memory_space<any>>) target(%1 : memref<1x2048xf32, #tpu.memory_space<any>>) target_semaphore(%3 : memref<!tpu.dma_semaphore, #tpu.memory_space<semaphore_mem>>)
    %c0_i32_4 = arith.constant 0 : i32
    %c0_i32_5 = arith.constant 0 : i32
    %c0_i32_6 = arith.constant 0 : i32
    %4 = tpu.memref_slice %arg0[%c0_i32_5, %c0_i32_6] : memref<1x2048xf32, #tpu.memory_space<any>> -> memref<1x2048xf32, #tpu.memory_space<any>>
    %c0_i32_7 = arith.constant 0 : i32
    %c0_i32_8 = arith.constant 0 : i32
    %5 = tpu.memref_slice %arg1[%c0_i32_7, %c0_i32_8] : memref<1x2048xf32, #tpu.memory_space<any>> -> memref<1x2048xf32, #tpu.memory_space<any>>
    %6 = tpu.memref_slice %arg2[%c0_i32_4] : memref<1x!tpu.dma_semaphore, #tpu.memory_space<semaphore_mem>> -> memref<1x!tpu.dma_semaphore, #tpu.memory_space<semaphore_mem>>
    %7 = tpu.memref_squeeze %6 : memref<1x!tpu.dma_semaphore, #tpu.memory_space<semaphore_mem>> -> memref<!tpu.dma_semaphore, #tpu.memory_space<semaphore_mem>>
    tpu.wait_dma2 semaphore(%7 : memref<!tpu.dma_semaphore, #tpu.memory_space<semaphore_mem>>) src(%4 : memref<1x2048xf32, #tpu.memory_space<any>>) dst(%5 : memref<1x2048xf32, #tpu.memory_space<any>>)
    return
  }
}

</mosaic_0001>

<llo_original>
// kernel: tpu_custom_call.1
$region0: #{tpu_custom_call.1}
  #allocation0 [shape = 'u32[]', space=smem, size = 0x4, offset = 0x4, fixed_abs, tag = 'smem constant byte address 0x4 - core index']
  #allocation1 [shape = 'u32[144,128]{1,0:T(1,128)}', space=vmem, size = 0x12000, scoped, tag = 'internal scratch']
  #allocation2 [shape = 's32[1]{0}', space=sflag, size = 0x4, scoped, tag = 'scratch operand']
  #allocation3 [shape = 's32[]', space=sflag, size = 0x4, offset = 0, fixed_abs, tag = 'sflag constant byte address 0x0 - dummy sync flag']
  #allocation4 [shape = 'u32[0]{0}', space=smem, size = 0, offset = 0, fixed_abs, tag = 'smem constant byte address 0x0 - null']
  %s0 = inlined_call_operand.hbm [shape: f32[1,2048], index: 0, kind: input, shape index: {}]
  %s1 = inlined_call_operand.hbm [shape: f32[1,2048], index: 1, kind: output, shape index: {}]
  %s2 = sld [smem:[#allocation0]]
  $region2: #{tpu_custom_call.1} parent=0
    _
  %s4 = ssub.s32 1, %s2
  %s5 = scalar_select 0, %s4, %s2
  %s7 = sshll.u32 1, 14
  %s8 = sxor.u32 4294967295, %s7
  %12 = dma.general %s0, 256, %s1, [#allocation2], 131072, [#allocation4], 0, 0
  %s13 = smul.u32 1, 16
  %s14 = sshll.u32 %s13, 4
  %15 = dma.done [#allocation2], %s14
  %16 = vsyncmov [#allocation2]
  %s17 = vpop.sfrf %16
  %p18 = scmp.eq.s32.totalorder %s17, 0
  %p19 = pneg %p18
  %21 = shalt.err (%p19)

</llo_original>
